<compile_context>
chip_gen: v7x
topology: tpu7x:2x2x1
jax: 0.10.0
libtpu: 0.0.40
codegen_flags: <defaults>
</compile_context>

<pallas_src>
import functools

import jax
import jax.numpy as jnp
from jax.experimental import pallas as pl
from jax.experimental.pallas import tpu as pltpu


def _half_in_kernel(x_ref, g_ref, b_ref, o_ref, *, eps):
    # x_ref/o_ref: (1, CT, HW) — one channel tile of one half of one sample.
    # g_ref/b_ref: (CT, 1)     — per-channel affine params (f32).
    row = pl.program_id(0)
    is_norm = (row % 2) == 0  # even row -> first (normalized) half of channels

    @pl.when(is_norm)
    def _():
        x = x_ref[0].astype(jnp.float32)                    # (CT, HW)
        mean = jnp.mean(x, axis=-1, keepdims=True)          # (CT, 1)
        xc = x - mean
        var = jnp.mean(xc * xc, axis=-1, keepdims=True)     # biased, like PyTorch IN
        inv = jax.lax.rsqrt(var + eps)                      # (CT, 1), EUP
        o_ref[0] = (xc * (inv * g_ref[...]) + b_ref[...]).astype(o_ref.dtype)

    @pl.when(jnp.logical_not(is_norm))
    def _():
        # Pass-through half: straight copy (mem-bound, hidden under the DMA
        # pipeline).
        o_ref[...] = x_ref[...]


def _choose_channel_tile(ch, hw, itemsize, target_bytes=4 * 1024 * 1024):
    """Largest channel tile CT with: CT | ch, (CT % 8 == 0 or CT == ch), and the
    (CT, HW) block roughly within target_bytes."""
    if ch % 8 != 0 or ch * hw * itemsize <= target_bytes:
        return ch
    max_ct = max(8, (target_bytes // (hw * itemsize)) // 8 * 8)
    for cand in range(min(max_ct, ch), 7, -8):
        if ch % cand == 0:
            return cand
    return ch


@functools.partial(jax.jit, static_argnames=("eps",))
def half_in(x, gamma, beta, *, eps=1e-5):
    """Half instance-norm.  x: (N, C, H, W); gamma/beta: (C//2,)."""
    N, C, H, W = x.shape
    Ch = C // 2
    HW = H * W

    # Pure-view reshape: row 2n = channels [0, Ch) of sample n (normalized),
    # row 2n+1 = channels [Ch, C) of sample n (pass-through).
    x3 = x.reshape(N * 2, Ch, HW)
    g2 = gamma.astype(jnp.float32).reshape(Ch, 1)
    b2 = beta.astype(jnp.float32).reshape(Ch, 1)

    CT = _choose_channel_tile(Ch, HW, jnp.dtype(x.dtype).itemsize)
    # TODO(synk): if Ch is small but H*W is huge, the (CT, HW) slab could exceed
    # VMEM; a two-pass spatially-tiled mean/var reduction would be needed then.

    kernel = functools.partial(_half_in_kernel, eps=float(eps))
    out = pl.pallas_call(
        kernel,
        out_shape=jax.ShapeDtypeStruct((N * 2, Ch, HW), x.dtype),
        grid_spec=pltpu.PrefetchScalarGridSpec(
            num_scalar_prefetch=0,
            grid=(N * 2, Ch // CT),
            in_specs=[
                pl.BlockSpec((1, CT, HW), lambda r, c: (r, c, 0)),
                pl.BlockSpec((CT, 1), lambda r, c: (c, 0)),
                pl.BlockSpec((CT, 1), lambda r, c: (c, 0)),
            ],
            out_specs=pl.BlockSpec((1, CT, HW), lambda r, c: (r, c, 0)),
        ),
        compiler_params=pltpu.CompilerParams(
            dimension_semantics=("parallel", "parallel"),
            vmem_limit_bytes=32 * 1024 * 1024,
        ),
    )(x3, g2, b2)

    return out.reshape(N, C, H, W)


def half_in_reference(x, gamma, beta, *, eps=1e-5):
    N, C, H, W = x.shape
    Ch = C // 2
    x1, x2 = x[:, :Ch], x[:, Ch:]
    x1f = x1.astype(jnp.float32)
    mean = jnp.mean(x1f, axis=(2, 3), keepdims=True)
    var = jnp.mean((x1f - mean) ** 2, axis=(2, 3), keepdims=True)
    y = (x1f - mean) * jax.lax.rsqrt(var + eps)
    y = y * gamma.reshape(1, Ch, 1, 1) + beta.reshape(1, Ch, 1, 1)
    return jnp.concatenate([y.astype(x.dtype), x2], axis=1)


if __name__ == "__main__":
    key = jax.random.PRNGKey(0)
    kx, kg, kb = jax.random.split(key, 3)

    N, C, H, W = 2, 4, 16, 16          # feature = C = 4 -> norm over C//2 = 2 channels
    x = jax.random.normal(kx, (N, C, H, W), dtype=jnp.float32)

    # PyTorch default affine init is ones/zeros; perturb so the affine path is
    # actually exercised.
    gamma = 1.0 + 0.1 * jax.random.normal(kg, (C // 2,), dtype=jnp.float32)
    beta = 0.1 * jax.random.normal(kb, (C // 2,), dtype=jnp.float32)

    out = half_in(x, gamma, beta)
    out = jax.block_until_ready(out)

    ref = half_in_reference(x, gamma, beta)
    assert out.shape == (N, C, H, W)
    assert jnp.allclose(out, ref, atol=1e-5, rtol=1e-5), "mismatch vs reference"

    print("KERNEL_OK")
</pallas_src>

<mosaic_0001>
module attributes {stable_mosaic.version = 11 : i64} {
  func.func @_half_in_kernel(%arg0: i32, %arg1: i32, %arg2: memref<1x2x256xf32, #tpu.memory_space<vmem>>, %arg3: memref<2x1xf32, #tpu.memory_space<vmem>>, %arg4: memref<2x1xf32, #tpu.memory_space<vmem>>, %arg5: memref<1x2x256xf32, #tpu.memory_space<vmem>>) attributes {dimension_semantics = [#tpu.dimension_semantics<parallel>, #tpu.dimension_semantics<parallel>], iteration_bounds = array<i64: 4, 1>, scalar_prefetch = 0 : i64, scratch_operands = 0 : i64, tpu.core_type = #tpu.core_type<tc>, window_params = [{transform_indices = @transform_0, window_bounds = array<i64: 1, 2, 256>}, {transform_indices = @transform_1, window_bounds = array<i64: 2, 1>}, {transform_indices = @transform_2, window_bounds = array<i64: 2, 1>}, {transform_indices = @transform_3, window_bounds = array<i64: 1, 2, 256>}]} {
    %c2_i32 = arith.constant 2 : i32
    %c0_i32 = arith.constant 0 : i32
    %0 = arith.cmpi eq, %c2_i32, %c0_i32 : i32
    %c1_i32 = arith.constant 1 : i32
    %1 = arith.select %0, %c1_i32, %c2_i32 : i32
    %2 = arith.remsi %arg0, %1 : i32
    %c0_i32_0 = arith.constant 0 : i32
    %3 = arith.cmpi ne, %2, %c0_i32_0 : i32
    %c0_i32_1 = arith.constant 0 : i32
    %4 = arith.cmpi slt, %2, %c0_i32_1 : i32
    %c0_i32_2 = arith.constant 0 : i32
    %5 = arith.cmpi slt, %1, %c0_i32_2 : i32
    %6 = arith.xori %4, %5 : i1
    %7 = arith.andi %6, %3 : i1
    %8 = arith.addi %2, %1 : i32
    %9 = arith.select %7, %8, %2 : i32
    %c0_i32_3 = arith.constant 0 : i32
    %10 = arith.cmpi eq, %9, %c0_i32_3 : i32
    %11 = arith.extui %10 : i1 to i32
    %c0_i32_4 = arith.constant 0 : i32
    %12 = arith.cmpi ne, %11, %c0_i32_4 : i32
    scf.if %12 {
      %c0 = arith.constant 0 : index
      %c0_6 = arith.constant 0 : index
      %c0_7 = arith.constant 0 : index
      %16 = vector.load %arg2[%c0, %c0_6, %c0_7] : memref<1x2x256xf32, #tpu.memory_space<vmem>>, vector<1x2x256xf32>
      %17 = vector.shape_cast %16 : vector<1x2x256xf32> to vector<2x256xf32>
      %cst = arith.constant dense<0.000000e+00> : vector<2xf32>
      %18 = vector.multi_reduction <add>, %17, %cst [1] : vector<2x256xf32> to vector<2xf32>
      %19 = vector.shape_cast %18 : vector<2xf32> to vector<2x1xf32>
      %cst_8 = arith.constant 2.560000e+02 : f32
      %20 = vector.broadcast %cst_8 : f32 to vector<2x1xf32>
      %21 = arith.divf %19, %20 : vector<2x1xf32>
      %22 = vector.broadcast %21 : vector<2x1xf32> to vector<2x256xf32>
      %23 = arith.subf %17, %22 : vector<2x256xf32>
      %24 = arith.mulf %23, %23 : vector<2x256xf32>
      %cst_9 = arith.constant dense<0.000000e+00> : vector<2xf32>
      %25 = vector.multi_reduction <add>, %24, %cst_9 [1] : vector<2x256xf32> to vector<2xf32>
      %26 = vector.shape_cast %25 : vector<2xf32> to vector<2x1xf32>
      %cst_10 = arith.constant 2.560000e+02 : f32
      %27 = vector.broadcast %cst_10 : f32 to vector<2x1xf32>
      %28 = arith.divf %26, %27 : vector<2x1xf32>
      %cst_11 = arith.constant 9.99999974E-6 : f32
      %29 = vector.broadcast %cst_11 : f32 to vector<2x1xf32>
      %30 = arith.addf %28, %29 : vector<2x1xf32>
      %31 = math.rsqrt %30 : vector<2x1xf32>
      %c0_12 = arith.constant 0 : index
      %c0_13 = arith.constant 0 : index
      %32 = vector.load %arg3[%c0_12, %c0_13] : memref<2x1xf32, #tpu.memory_space<vmem>>, vector<2x1xf32>
      %33 = arith.mulf %31, %32 : vector<2x1xf32>
      %34 = vector.broadcast %33 : vector<2x1xf32> to vector<2x256xf32>
      %35 = arith.mulf %23, %34 : vector<2x256xf32>
      %c0_14 = arith.constant 0 : index
      %c0_15 = arith.constant 0 : index
      %36 = vector.load %arg4[%c0_14, %c0_15] : memref<2x1xf32, #tpu.memory_space<vmem>>, vector<2x1xf32>
      %37 = vector.broadcast %36 : vector<2x1xf32> to vector<2x256xf32>
      %38 = arith.addf %35, %37 : vector<2x256xf32>
      %c0_16 = arith.constant 0 : index
      %c0_17 = arith.constant 0 : index
      %c0_18 = arith.constant 0 : index
      %39 = vector.load %arg5[%c0_16, %c0_17, %c0_18] : memref<1x2x256xf32, #tpu.memory_space<vmem>>, vector<1x2x256xf32>
      %40 = vector.shape_cast %39 : vector<1x2x256xf32> to vector<2x256xf32>
      %41 = vector.shape_cast %38 : vector<2x256xf32> to vector<1x2x256xf32>
      tpu.vector_store %arg5[%c0_16, %c0_17, %c0_18], %41 {strides = array<i32>} : memref<1x2x256xf32, #tpu.memory_space<vmem>>, vector<1x2x256xf32>,
    } else {
    }
    %true = arith.constant true
    %13 = arith.xori %10, %true : i1
    %14 = arith.extui %13 : i1 to i32
    %c0_i32_5 = arith.constant 0 : i32
    %15 = arith.cmpi ne, %14, %c0_i32_5 : i32
    scf.if %15 {
      %c0 = arith.constant 0 : index
      %c0_6 = arith.constant 0 : index
      %c0_7 = arith.constant 0 : index
      %16 = vector.load %arg2[%c0, %c0_6, %c0_7] : memref<1x2x256xf32, #tpu.memory_space<vmem>>, vector<1x2x256xf32>
      %c0_8 = arith.constant 0 : index
      %c0_9 = arith.constant 0 : index
      %c0_10 = arith.constant 0 : index
      %17 = vector.load %arg5[%c0_8, %c0_9, %c0_10] : memref<1x2x256xf32, #tpu.memory_space<vmem>>, vector<1x2x256xf32>
      tpu.vector_store %arg5[%c0_8, %c0_9, %c0_10], %16 {strides = array<i32>} : memref<1x2x256xf32, #tpu.memory_space<vmem>>, vector<1x2x256xf32>,
    } else {
    }
    return
  }
  func.func @transform_0(%arg0: i32, %arg1: i32) -> (i32, i32, i32) {
    %c0_i32 = arith.constant 0 : i32
    %c0_i32_0 = arith.constant 0 : i32
    return %arg0, %arg1, %c0_i32 : i32, i32, i32
  }
  func.func @transform_1(%arg0: i32, %arg1: i32) -> (i32, i32) {
    %c0_i32 = arith.constant 0 : i32
    %c0_i32_0 = arith.constant 0 : i32
    return %arg1, %c0_i32 : i32, i32
  }
  func.func @transform_2(%arg0: i32, %arg1: i32) -> (i32, i32) {
    %c0_i32 = arith.constant 0 : i32
    %c0_i32_0 = arith.constant 0 : i32
    return %arg1, %c0_i32 : i32, i32
  }
  func.func @transform_3(%arg0: i32, %arg1: i32) -> (i32, i32, i32) {
    %c0_i32 = arith.constant 0 : i32
    %c0_i32_0 = arith.constant 0 : i32
    return %arg0, %arg1, %c0_i32 : i32, i32, i32
  }
}

</mosaic_0001>

<llo_original>
// kernel: half_in.1
$region0: #{half_in.1}
  #allocation0 [shape = 'u32[]', space=smem, size = 0x4, offset = 0x4, fixed_abs, tag = 'smem constant byte address 0x4 - core index']
  #allocation1 [shape = 'u32[144,128]{1,0:T(1,128)}', space=vmem, size = 0x12000, scoped, tag = 'internal scratch']
  %s0 = inlined_call_operand.vmem [shape: f32[4,2,256], index: 0, kind: input, shape index: {}]
  %s1 = inlined_call_operand.vmem [shape: f32[2,1], index: 1, kind: input, shape index: {}]
  %s2 = inlined_call_operand.vmem [shape: f32[2,1], index: 2, kind: input, shape index: {}]
  %s3 = inlined_call_operand.vmem [shape: f32[4,2,256], index: 3, kind: output, shape index: {}]
  %s4 = sld [smem:[#allocation0]]
  $region53: #{half_in.1} parent=0
    _
  %s6 = ssub.s32 1, %s4
  %s7 = scalar_select 0, %s6, %s4
  loop: start=0, step=1, limit=6
  $region2: #{half_in.1} parent=0 // loop_pre_header
    _
  $region3: #{half_in.1} parent=0 // loop_header
    %s9 = sphi 0, %s13
    %p10 = scmp.ge.s32.totalorder %s9, 6
    %s16 = sphi 0, %s28
    %s17 = sphi 0, %s24
    %s18 = sphi 0, %s16
    %s19 = sphi 0, %s17
    %s20 = sphi 0, %s18
    %s21 = sphi 0, %s19
    %s33 = sphi 0, %s35
    %s36 = sphi 0, %s33
    %s37 = sphi 0, %s36
    %s53 = sphi 0, %s37
    %s59 = sphi 0, %s61
    %s62 = sphi 0, %s59
    %s63 = sphi 0, %s62
    %s79 = sphi 0, %s63
    %s85 = sphi 0, %s87
    %s88 = sphi 0, %s85
    %s89 = sphi 0, %s88
    %s105 = sphi 0, %s89
    %s113 = sphi 0, %s115
    %s116 = sphi 0, %s113
    %s117 = sphi 0, %s116
    %s133 = sphi 0, %s117
  $region4: #{half_in.1} parent=0 // loop_header_branch
    %12 = sbr.rel (%p10) target = $region8
  $region5: #{half_in.1} parent=0 // loop_body
    %s14 = ssub.s32 %s9, 1
    %s15 = ssub.s32 %s9, 2
    %s22 = sadd.s32 1, %s17
    %p23 = scmp.ge.s32.totalorder %s22, 1
    %s24 = scalar_select %p23, 0, %s22
    %s25 = sadd.s32 1, %s16
    %s26 = scalar_select %p23, %s25, %s16
    %p27 = scmp.ge.s32.totalorder %s26, 4
    %s28 = scalar_select %p27, 0, %s26
    %s29 = ssub.s32 %s16, %s28
    %s30 = ssub.s32 %s17, %s24
    %s31 = sor.u32 %s29, %s30
    %p32 = scmp.eq.s32.totalorder %s31, 0
    %s34 = sadd.s32 %s33, 1
    %s35 = scalar_select %p32, %s33, %s34
    %p38 = pneg %p32
    %p39 = scmp.eq.s32.totalorder %s9, 3
    %p40 = por %p38, %p39
    %p41 = scmp.ne.s32.totalorder %s33, %s36
    %p42 = scmp.eq.s32.totalorder %s9, 0
    %p43 = por %p41, %p42
    %p44 = scmp.ne.s32.totalorder %s33, %s36
    %p45 = scmp.eq.s32.totalorder %s14, 3
    %p46 = por %p44, %p45
    %p47 = scmp.ne.s32.totalorder %s36, %s37
    %p48 = scmp.eq.s32.totalorder %s14, 0
    %p49 = por %p47, %p48
    %p50 = scmp.ne.s32.totalorder %s36, %s37
    %p51 = scmp.eq.s32.totalorder %s15, 3
    %p52 = por %p50, %p51
    %p54 = scmp.ne.s32.totalorder %s37, %s53
    %p55 = scmp.eq.s32.totalorder %s15, 0
    %p56 = por %p54, %p55
    %s57 = ssub.s32 %s17, %s24
    %p58 = scmp.eq.s32.totalorder %s57, 0
    %s60 = sadd.s32 %s59, 1
    %s61 = scalar_select %p58, %s59, %s60
    %p64 = pneg %p58
    %p65 = scmp.eq.s32.totalorder %s9, 3
    %p66 = por %p64, %p65
    %p67 = scmp.ne.s32.totalorder %s59, %s62
    %p68 = scmp.eq.s32.totalorder %s9, 0
    %p69 = por %p67, %p68
    %p70 = scmp.ne.s32.totalorder %s59, %s62
    %p71 = scmp.eq.s32.totalorder %s14, 3
    %p72 = por %p70, %p71
    %p73 = scmp.ne.s32.totalorder %s62, %s63
    %p74 = scmp.eq.s32.totalorder %s14, 0
    %p75 = por %p73, %p74
    %p76 = scmp.ne.s32.totalorder %s62, %s63
    %p77 = scmp.eq.s32.totalorder %s15, 3
    %p78 = por %p76, %p77
    %p80 = scmp.ne.s32.totalorder %s63, %s79
    %p81 = scmp.eq.s32.totalorder %s15, 0
    %p82 = por %p80, %p81
    %s83 = ssub.s32 %s17, %s24
    %p84 = scmp.eq.s32.totalorder %s83, 0
    %s86 = sadd.s32 %s85, 1
    %s87 = scalar_select %p84, %s85, %s86
    %p90 = pneg %p84
    %p91 = scmp.eq.s32.totalorder %s9, 3
    %p92 = por %p90, %p91
    %p93 = scmp.ne.s32.totalorder %s85, %s88
    %p94 = scmp.eq.s32.totalorder %s9, 0
    %p95 = por %p93, %p94
    %p96 = scmp.ne.s32.totalorder %s85, %s88
    %p97 = scmp.eq.s32.totalorder %s14, 3
    %p98 = por %p96, %p97
    %p99 = scmp.ne.s32.totalorder %s88, %s89
    %p100 = scmp.eq.s32.totalorder %s14, 0
    %p101 = por %p99, %p100
    %p102 = scmp.ne.s32.totalorder %s88, %s89
    %p103 = scmp.eq.s32.totalorder %s15, 3
    %p104 = por %p102, %p103
    %p106 = scmp.ne.s32.totalorder %s89, %s105
    %p107 = scmp.eq.s32.totalorder %s15, 0
    %p108 = por %p106, %p107
    %s109 = ssub.s32 %s16, %s28
    %s110 = ssub.s32 %s17, %s24
    %s111 = sor.u32 %s109, %s110
    %p112 = scmp.eq.s32.totalorder %s111, 0
    %s114 = sadd.s32 %s113, 1
    %s115 = scalar_select %p112, %s113, %s114
    %p118 = pneg %p112
    %p119 = scmp.eq.s32.totalorder %s9, 3
    %p120 = por %p118, %p119
    %p121 = scmp.ne.s32.totalorder %s113, %s116
    %p122 = scmp.eq.s32.totalorder %s9, 0
    %p123 = por %p121, %p122
    %p124 = scmp.ne.s32.totalorder %s113, %s116
    %p125 = scmp.eq.s32.totalorder %s14, 3
    %p126 = por %p124, %p125
    %p127 = scmp.ne.s32.totalorder %s116, %s117
    %p128 = scmp.eq.s32.totalorder %s14, 0
    %p129 = por %p127, %p128
    %p130 = scmp.ne.s32.totalorder %s116, %s117
    %p131 = scmp.eq.s32.totalorder %s15, 3
    %p132 = por %p130, %p131
    %p134 = scmp.ne.s32.totalorder %s117, %s133
    %p135 = scmp.eq.s32.totalorder %s15, 0
    %p136 = por %p134, %p135
    %p137 = scmp.le.s32.totalorder 1, %s9
    %p138 = scmp.lt.s32.totalorder %s9, 5
    %p139 = pnand %p137, %p138
    %p140 = pneg %p139
    // Predicated region
    $region9: #{half_in.1} parent=5 // pred_check
      _
    $region10: #{half_in.1} parent=5 // pred_check_branch
      %142 = sbr.rel (%p139) target = $region12
    $region11: #{half_in.1} parent=5 // pred_region
      %s143 = ssub.s32 %s9, 1
      // Predicated region
      $region13: #{half_in.1} parent=11 // pred_check
        %p144 = pneg %p75
      $region14: #{half_in.1} parent=11 // pred_check_branch
        %146 = sbr.rel (%p144) target = $region16
      $region15: #{half_in.1} parent=11 // pred_region
        %p147 = scmp.lt.s32.totalorder %s19, 0
        %s148 = scalar_select %p147, %s19, 0
        %s149 = smul.addr %s148, 2
        %s150 = scalar_lea.vmem %s1, %s149
      $region16: #{half_in.1} parent=11 // pred_fallthru
        _
      // Predicated region
      $region17: #{half_in.1} parent=11 // pred_check
        %p151 = pneg %p101
      $region18: #{half_in.1} parent=11 // pred_check_branch
        %153 = sbr.rel (%p151) target = $region20
      $region19: #{half_in.1} parent=11 // pred_region
        %p154 = scmp.lt.s32.totalorder %s19, 0
        %s155 = scalar_select %p154, %s19, 0
        %s156 = smul.addr %s155, 2
        %s157 = scalar_lea.vmem %s2, %s156
      $region20: #{half_in.1} parent=11 // pred_fallthru
        _
    $region12: #{half_in.1} parent=5 // pred_fallthru
      _
    %p158 = scmp.lt.s32.totalorder %s9, 4
    // Predicated region
    $region21: #{half_in.1} parent=5 // pred_check
      %p159 = pneg %p158
    $region22: #{half_in.1} parent=5 // pred_check_branch
      %161 = sbr.rel (%p159) target = $region24
    $region23: #{half_in.1} parent=5 // pred_region
      // Predicated region
      $region25: #{half_in.1} parent=23 // pred_check
        %p162 = pneg %p43
      $region26: #{half_in.1} parent=23 // pred_check_branch
        %164 = sbr.rel (%p162) target = $region28
      $region27: #{half_in.1} parent=23 // pred_region
        %p165 = scmp.lt.s32.totalorder %s16, 3
        %s166 = scalar_select %p165, %s16, 3
        %p167 = scmp.lt.s32.totalorder %s17, 0
        %s168 = scalar_select %p167, %s17, 0
        %s169 = smul.addr %s168, 2
        %s170 = smul.addr %s166, 2
        %s171 = sadd.s32 %s169, %s170
        %s172 = smul.addr %s171, 2
        %s173 = scalar_lea.vmem %s0, %s172
      $region28: #{half_in.1} parent=23 // pred_fallthru
        _
    $region24: #{half_in.1} parent=5 // pred_fallthru
      _
    %p174 = scmp.le.s32.totalorder 1, %s9
    %p175 = scmp.lt.s32.totalorder %s9, 5
    %p176 = pnand %p174, %p175
    %p177 = pneg %p176
    // Predicated region
    $region29: #{half_in.1} parent=5 // pred_check
      _
    $region30: #{half_in.1} parent=5 // pred_check_branch
      %179 = sbr.rel (%p176) target = $region32
    $region31: #{half_in.1} parent=5 // pred_region
      %s180 = ssub.s32 %s9, 1
      %p181 = scmp.lt.s32.totalorder %s18, 3
      %s182 = scalar_select %p181, %s18, 3
      %p183 = scmp.lt.s32.totalorder %s19, 0
      %s184 = scalar_select %p183, %s19, 0
      %s185 = smul.addr %s184, 2
      %s186 = smul.addr %s182, 2
      %s187 = sadd.s32 %s185, %s186
      %s188 = smul.addr %s187, 2
      %s189 = scalar_lea.vmem %s0, %s188
      %p190 = pneg %p49
      %p191 = pneg %p46
      %p192 = scmp.lt.s32.totalorder %s19, 0
      %s193 = scalar_select %p192, %s19, 0
      %s194 = smul.addr %s193, 2
      %s195 = scalar_lea.vmem %s1, %s194
      %p196 = pneg %p75
      %p197 = pneg %p72
      %p198 = scmp.lt.s32.totalorder %s19, 0
      %s199 = scalar_select %p198, %s19, 0
      %s200 = smul.addr %s199, 2
      %s201 = scalar_lea.vmem %s2, %s200
      %p202 = pneg %p101
      %p203 = pneg %p98
      %p204 = pneg %p129
      %p205 = pneg %p126
      %p206 = scmp.lt.s32.totalorder %s18, 3
      %s207 = scalar_select %p206, %s18, 3
      %p208 = scmp.lt.s32.totalorder %s19, 0
      %s209 = scalar_select %p208, %s19, 0
      %s210 = smul.addr %s209, 2
      %s211 = smul.addr %s207, 2
      %s212 = sadd.s32 %s210, %s211
      %s213 = smul.addr %s212, 2
      %s214 = scalar_lea.vmem %s3, %s213
      %p215 = scmp.lt.s32.totalorder %s18, 3
      %s216 = scalar_select %p215, %s18, 3
      %p217 = scmp.lt.s32.totalorder %s19, 0
      %s218 = scalar_select %p217, %s19, 0
      %s219 = smul.addr %s218, 2
      %s220 = smul.addr %s216, 2
      %s221 = sadd.s32 %s219, %s220
      %s222 = smul.addr %s221, 2
      %s223 = scalar_lea.vmem %s0, %s222
      %p224 = scmp.lt.s32.totalorder %s19, 0
      %s225 = scalar_select %p224, %s19, 0
      %s226 = smul.addr %s225, 2
      %s227 = scalar_lea.vmem %s1, %s226
      %p228 = scmp.lt.s32.totalorder %s19, 0
      %s229 = scalar_select %p228, %s19, 0
      %s230 = smul.addr %s229, 2
      %s231 = scalar_lea.vmem %s2, %s230
      %p232 = scmp.lt.s32.totalorder %s18, 3
      %s233 = scalar_select %p232, %s18, 3
      %p234 = scmp.lt.s32.totalorder %s19, 0
      %s235 = scalar_select %p234, %s19, 0
      %s236 = smul.addr %s235, 2
      %s237 = smul.addr %s233, 2
      %s238 = sadd.s32 %s236, %s237
      %s239 = smul.addr %s238, 2
      %s240 = scalar_lea.vmem %s3, %s239
      %p241 = scmp.lt.s32.totalorder %s18, 0
      %s242 = ssub.s32 0, %s18
      %s243 = scalar_select %p241, %s242, %s18
      %s244 = sand.u32 %s243, 1
      %s245 = ssub.s32 0, %s244
      %s246 = scalar_select %p241, %s245, %s244
      %p247 = scmp.ne.s32.totalorder %s246, 0
      %p248 = scmp.lt.s32.totalorder %s246, 0
      %p249 = pnand %p248, %p247
      %p250 = pneg %p249
      %s251 = sadd.s32 %s246, 2
      %s252 = scalar_select %p250, %s251, %s246
      %p253 = scmp.eq.s32.totalorder %s252, 0
      // Predicated region
      $region33: #{half_in.1} parent=31 // pred_check
        %p254 = pneg %p253
      $region34: #{half_in.1} parent=31 // pred_check_branch
        %256 = sbr.rel (%p254) target = $region36
      $region35: #{half_in.1} parent=31 // pred_region
        %v257 = vld [vmem:[%s223] sm:$0xf]
        %v260 = vunpack.c.l.s4 1983009808
        %v261 = vunpack.c.0.s8 %v260
        %v262 = vlaneseq
        %v263 = vshrl.u32 %v262, 7
        %v264 = vsub.s32 %v261, %v263
        %v265 = vrot.slane %v257, %v264
        %v266 = vcombine.high %v265, %v265
        %vm269 = vcmask 1041408
        %v270 = vsel %vm269, %v265, 0.0
        %v271 = vsel %vm269, %v266, 0.0
        %v272 = vadd.f32 %v270, %v271
        %273 = vadd.xlane.f32.xlu0 %v272
        %v274 = vpop.xlane.xlu0 %273
        %v275 = vrcp.pop 256.0
        %v276 = vmul.f32 %v274, %v275
        %v279 = vunpack.c.l.s4 269488144
        %v280 = vunpack.c.0.s8 %v279
        %v281 = vlaneseq
        %v282 = vshrl.u32 %v281, 7
        %v283 = vsub.s32 %v280, %v282
        %v284 = vrot.slane %v276, %v283
        %v286 = vsub.f32 %v257, %v284
        %v287 = vmul.f32 %v286, %v286
        %v290 = vunpack.c.l.s4 1983009808
        %v291 = vunpack.c.0.s8 %v290
        %v292 = vlaneseq
        %v293 = vshrl.u32 %v292, 7
        %v294 = vsub.s32 %v291, %v293
        %v295 = vrot.slane %v287, %v294
        %v296 = vcombine.high %v295, %v295
        %v299 = vsel %vm269, %v295, 0.0
        %v300 = vsel %vm269, %v296, 0.0
        %v301 = vadd.f32 %v299, %v300
        %302 = vadd.xlane.f32.xlu0 %v301
        %v303 = vpop.xlane.xlu0 %302
        %v304 = vmul.f32 %v303, %v275
        %v305 = vadd.f32 %v304, 1e-05
        %v306 = vrsqrt.pop %v305
        %v307 = vld [vmem:[%s227] sm:$0x3]
        %v308 = vmul.f32 %v306, %v307
        %310 = vset.pattern.permute.xlu0 0
        %311 = vperm.xlu0 %310, %v308
        %v312 = vpop.permute.xlu0 %311
        %v314 = vunpack.c.l.s4 269488144
        %v315 = vunpack.c.0.s8 %v314
        %v316 = vlaneseq
        %v317 = vshrl.u32 %v316, 7
        %v318 = vsub.s32 %v315, %v317
        %v319 = vrot.slane %v312, %v318
        %v321 = vmul.f32 %v286, %v319
        %v322 = vld [vmem:[%s231] sm:$0x3]
        %324 = vset.pattern.permute.xlu0 0
        %325 = vperm.xlu0 %324, %v322
        %v326 = vpop.permute.xlu0 %325
        %v328 = vunpack.c.l.s4 269488144
        %v329 = vunpack.c.0.s8 %v328
        %v330 = vlaneseq
        %v331 = vshrl.u32 %v330, 7
        %v332 = vsub.s32 %v329, %v331
        %v333 = vrot.slane %v326, %v332
        %v335 = vadd.f32 %v321, %v333
        %336 = vst [vmem:[%s240] sm:$0xf] %v335
      $region36: #{half_in.1} parent=31 // pred_fallthru
        _
      %p337 = scmp.ne.s32.totalorder %s252, 0
      // Predicated region
      $region37: #{half_in.1} parent=31 // pred_check
        %p338 = pneg %p337
      $region38: #{half_in.1} parent=31 // pred_check_branch
        %340 = sbr.rel (%p338) target = $region40
      $region39: #{half_in.1} parent=31 // pred_region
        %v341 = vld [vmem:[%s223] sm:$0xf]
        %342 = vst [vmem:[%s240] sm:$0xf] %v341
      $region40: #{half_in.1} parent=31 // pred_fallthru
        _
      %p343 = scmp.lt.s32.totalorder %s18, 3
      %s344 = scalar_select %p343, %s18, 3
      %p345 = scmp.lt.s32.totalorder %s19, 0
      %s346 = scalar_select %p345, %s19, 0
      %s347 = smul.addr %s346, 2
      %s348 = smul.addr %s344, 2
      %s349 = sadd.s32 %s347, %s348
      %s350 = smul.addr %s349, 2
      %s351 = scalar_lea.vmem %s3, %s350
      // Predicated region
      $region41: #{half_in.1} parent=31 // pred_check
        %p352 = pneg %p126
      $region42: #{half_in.1} parent=31 // pred_check_branch
        %354 = sbr.rel (%p352) target = $region44
      $region43: #{half_in.1} parent=31 // pred_region
        _
      $region44: #{half_in.1} parent=31 // pred_fallthru
        _
    $region32: #{half_in.1} parent=5 // pred_fallthru
      _
    %p355 = scmp.le.s32.totalorder 2, %s9
    // Predicated region
    $region45: #{half_in.1} parent=5 // pred_check
      %p356 = pneg %p355
    $region46: #{half_in.1} parent=5 // pred_check_branch
      %358 = sbr.rel (%p356) target = $region48
    $region47: #{half_in.1} parent=5 // pred_region
      %s359 = ssub.s32 %s9, 2
      // Predicated region
      $region49: #{half_in.1} parent=47 // pred_check
        %p360 = pneg %p132
      $region50: #{half_in.1} parent=47 // pred_check_branch
        %362 = sbr.rel (%p360) target = $region52
      $region51: #{half_in.1} parent=47 // pred_region
        %p363 = scmp.lt.s32.totalorder %s20, 3
        %s364 = scalar_select %p363, %s20, 3
        %p365 = scmp.lt.s32.totalorder %s21, 0
        %s366 = scalar_select %p365, %s21, 0
        %s367 = smul.addr %s366, 2
        %s368 = smul.addr %s364, 2
        %s369 = sadd.s32 %s367, %s368
        %s370 = smul.addr %s369, 2
        %s371 = scalar_lea.vmem %s3, %s370
      $region52: #{half_in.1} parent=47 // pred_fallthru
        _
    $region48: #{half_in.1} parent=5 // pred_fallthru
      _
  $region6: #{half_in.1} parent=0 // loop_footer
    %s13 = sadd.s32 1, %s9
  $region7: #{half_in.1} parent=0 // loop_footer_branch
    %8 = sbr.rel target = $region3
  $region8: #{half_in.1} parent=0 // loop_exit
    _

</llo_original>
